<compile_context>
chip_gen: v5e
topology: v5e:2x2
jax: 0.10.0
libtpu: 0.0.40
codegen_flags: <defaults>
</compile_context>

<pallas_src>
import math
import functools

import jax
import jax.numpy as jnp
from jax.experimental import pallas as pl
from jax.experimental.pallas import tpu as pltpu


_NEG_INF = -1e30


@functools.lru_cache(maxsize=None)
def _vmem_limit_bytes():
    """~48 MiB on v7x (64 MiB physical VMEM), ~96 MiB on v5e/v6e (128 MiB)."""
    cap = 64 * 1024 * 1024
    try:
        info = pltpu.get_tpu_info()
        cap = int(getattr(info, "vmem_capacity_bytes", cap))
    except Exception:
        pass
    return int(min(cap * 3 // 4, 100 * 1024 * 1024))


def _compiler_params(dim_semantics):
    return pltpu.CompilerParams(dimension_semantics=dim_semantics,
                                vmem_limit_bytes=_vmem_limit_bytes())


def _pick_row_tile(n, target=512):
    t = min(n, target)
    return max(8, (t // 8) * 8)          # always a multiple of 8


def _pick_k_tile(hid, target=1024):
    if hid <= target or hid % 128 != 0:
        return hid
    t = (target // 128) * 128
    while t >= 128:
        if hid % t == 0:
            return t
        t -= 128
    return hid


def _ln(x, g, b):
    mu = jnp.mean(x, axis=-1, keepdims=True)
    var = jnp.mean(jnp.square(x - mu), axis=-1, keepdims=True)
    return (x - mu) * jax.lax.rsqrt(var + 1e-5) * g + b


def _mask_bias(S, mask_kind, window):
    """Additive attention mask generated in-kernel (no [S,S] HBM stream)."""
    if mask_kind == "none":
        return None
    row = jax.lax.broadcasted_iota(jnp.int32, (S, S), 0)   # query index i
    col = jax.lax.broadcasted_iota(jnp.int32, (S, S), 1)   # key index j
    if mask_kind == "causal":
        blocked = col > row
    elif mask_kind == "local":
        blocked = (col > row) | (row - col > window)
    else:
        raise ValueError(mask_kind)
    return jnp.where(blocked, _NEG_INF, 0.0).astype(jnp.float32)


# --------------------------------------------------------------------------
# Kernel 1: self-attention block  (LN1 + QKV + MHA + out-proj + residual)
# --------------------------------------------------------------------------

def _self_block_kernel(tgt_ref, ln_g_ref, ln_b_ref, wqkv_ref, bqkv_ref,
                       wo_ref, bo_ref, o_ref, attn_ref,
                       *, n_head, mask_kind, window):
    S = tgt_ref.shape[1]
    D = tgt_ref.shape[2]
    Dh = D // n_head
    scale = 1.0 / math.sqrt(Dh)

    x = tgt_ref[0].astype(jnp.float32)                       # residual input [S, D]
    xn = _ln(x, ln_g_ref[...], ln_b_ref[...])                # LayerNorm (norm1)

    qkv = (jnp.dot(xn.astype(jnp.bfloat16), wqkv_ref[...],
                   preferred_element_type=jnp.float32)
           + bqkv_ref[...])                                  # [S, 3D] f32
    q = qkv[:, 0:D]
    k = qkv[:, D:2 * D].astype(jnp.bfloat16)
    v = qkv[:, 2 * D:3 * D].astype(jnp.bfloat16)

    bias = _mask_bias(S, mask_kind, window)                  # additive mask (in-kernel)

    for h in range(n_head):
        sl = slice(h * Dh, (h + 1) * Dh)
        qh = (q[:, sl] * scale).astype(jnp.bfloat16)         # fold 1/sqrt(Dh) into q
        s = jax.lax.dot_general(qh, k[:, sl], (((1,), (1,)), ((), ())),
                                preferred_element_type=jnp.float32)
        if bias is not None:
            s = s + bias
        s = s - jnp.max(s, axis=-1, keepdims=True)
        p = jnp.exp(s)
        p = p * pl.reciprocal(jnp.sum(p, axis=-1, keepdims=True), approx=True)
        oh = jnp.dot(p.astype(jnp.bfloat16), v[:, sl],
                     preferred_element_type=jnp.float32)
        attn_ref[:, sl] = oh.astype(jnp.bfloat16)            # pack heads in lanes

    proj = (jnp.dot(attn_ref[...], wo_ref[...],
                    preferred_element_type=jnp.float32) + bo_ref[...])
    o_ref[0] = (x + proj).astype(o_ref.dtype)                # residual add


def self_attn_block(tgt, p, n_head, mask_kind):
    B, S, D = tgt.shape
    sa = p['sa']
    kern = functools.partial(_self_block_kernel, n_head=n_head,
                             mask_kind=mask_kind, window=2)
    return pl.pallas_call(
        kern,
        out_shape=jax.ShapeDtypeStruct((B, S, D), tgt.dtype),
        grid=(B,),
        in_specs=[
            pl.BlockSpec((1, S, D), lambda b: (b, 0, 0)),      # tgt (residual)
            pl.BlockSpec((1, D), lambda b: (0, 0)),            # ln1 gamma
            pl.BlockSpec((1, D), lambda b: (0, 0)),            # ln1 beta
            pl.BlockSpec((D, 3 * D), lambda b: (0, 0)),        # packed Wqkv (bf16)
            pl.BlockSpec((1, 3 * D), lambda b: (0, 0)),        # packed bqkv
            pl.BlockSpec((D, D), lambda b: (0, 0)),            # Wo (bf16)
            pl.BlockSpec((1, D), lambda b: (0, 0)),            # bo
        ],
        out_specs=pl.BlockSpec((1, S, D), lambda b: (b, 0, 0)),
        scratch_shapes=[pltpu.VMEM((S, D), jnp.bfloat16)],     # packed attn output
        compiler_params=_compiler_params(("parallel",)),
    )(tgt,
      p['ln1_g'].reshape(1, D), p['ln1_b'].reshape(1, D),
      sa['wqkv'], sa['bqkv'].reshape(1, 3 * D),
      sa['wo'], sa['bo'].reshape(1, D))


# --------------------------------------------------------------------------
# Kernel 2: cross-attention + dynamic gating block
# --------------------------------------------------------------------------

def _cross_block_kernel(tgt_ref, img_ref, ln_g_ref, ln_b_ref,
                        wq_ref, bq_ref, wkv_ref, bkv_ref, wo_ref, bo_ref,
                        wgt_ref, wgi_ref, bg_ref, gg_ref, gb_ref,
                        o_ref, attn_ref, *, n_head):
    S = tgt_ref.shape[1]
    D = tgt_ref.shape[2]
    Dh = D // n_head
    scale = 1.0 / math.sqrt(Dh)

    x = tgt_ref[0].astype(jnp.float32)                       # residual input [S, D]
    xn = _ln(x, ln_g_ref[...], ln_b_ref[...])                # LayerNorm (norm2)
    xn_b = xn.astype(jnp.bfloat16)

    q = (jnp.dot(xn_b, wq_ref[...], preferred_element_type=jnp.float32)
         + bq_ref[...])                                      # [S, D] f32
    img = img_ref[0].astype(jnp.bfloat16)                    # [M, D]
    kv = (jnp.dot(img, wkv_ref[...], preferred_element_type=jnp.float32)
          + bkv_ref[...])                                    # [M, 2D] f32
    k = kv[:, 0:D].astype(jnp.bfloat16)
    v = kv[:, D:2 * D].astype(jnp.bfloat16)

    for h in range(n_head):
        sl = slice(h * Dh, (h + 1) * Dh)
        qh = (q[:, sl] * scale).astype(jnp.bfloat16)
        s = jax.lax.dot_general(qh, k[:, sl], (((1,), (1,)), ((), ())),
                                preferred_element_type=jnp.float32)
        s = s - jnp.max(s, axis=-1, keepdims=True)
        pr = jnp.exp(s)
        pr = pr * pl.reciprocal(jnp.sum(pr, axis=-1, keepdims=True), approx=True)
        oh = jnp.dot(pr.astype(jnp.bfloat16), v[:, sl],
                     preferred_element_type=jnp.float32)
        attn_ref[:, sl] = oh.astype(jnp.bfloat16)

    ca = (jnp.dot(attn_ref[...], wo_ref[...],
                  preferred_element_type=jnp.float32) + bo_ref[...])

    # DynamicGating: gate = sigmoid([xn, ca] @ Wg + bg)
    z = (jnp.dot(xn_b, wgt_ref[...], preferred_element_type=jnp.float32)
         + jnp.dot(ca.astype(jnp.bfloat16), wgi_ref[...],
                   preferred_element_type=jnp.float32)
         + bg_ref[...])
    gate = jax.nn.sigmoid(z)
    fused = gate * xn + (1.0 - gate) * ca                    # dropout == identity
    fused = _ln(fused, gg_ref[...], gb_ref[...])             # gate LayerNorm
    o_ref[0] = (x + fused).astype(o_ref.dtype)               # residual add


def cross_attn_gate_block(tgt, image_memory, p, n_head):
    B, S, D = tgt.shape
    M = image_memory.shape[1]
    ca = p['ca']
    kern = functools.partial(_cross_block_kernel, n_head=n_head)
    return pl.pallas_call(
        kern,
        out_shape=jax.ShapeDtypeStruct((B, S, D), tgt.dtype),
        grid=(B,),
        in_specs=[
            pl.BlockSpec((1, S, D), lambda b: (b, 0, 0)),      # tgt (residual)
            pl.BlockSpec((1, M, D), lambda b: (b, 0, 0)),      # image memory
            pl.BlockSpec((1, D), lambda b: (0, 0)),            # ln2 gamma
            pl.BlockSpec((1, D), lambda b: (0, 0)),            # ln2 beta
            pl.BlockSpec((D, D), lambda b: (0, 0)),            # Wq (bf16)
            pl.BlockSpec((1, D), lambda b: (0, 0)),            # bq
            pl.BlockSpec((D, 2 * D), lambda b: (0, 0)),        # packed Wkv (bf16)
            pl.BlockSpec((1, 2 * D), lambda b: (0, 0)),        # packed bkv
            pl.BlockSpec((D, D), lambda b: (0, 0)),            # Wo (bf16)
            pl.BlockSpec((1, D), lambda b: (0, 0)),            # bo
            pl.BlockSpec((D, D), lambda b: (0, 0)),            # gate W (text half)
            pl.BlockSpec((D, D), lambda b: (0, 0)),            # gate W (image half)
            pl.BlockSpec((1, D), lambda b: (0, 0)),            # gate bias
            pl.BlockSpec((1, D), lambda b: (0, 0)),            # gate LN gamma
            pl.BlockSpec((1, D), lambda b: (0, 0)),            # gate LN beta
        ],
        out_specs=pl.BlockSpec((1, S, D), lambda b: (b, 0, 0)),
        scratch_shapes=[pltpu.VMEM((S, D), jnp.bfloat16)],
        compiler_params=_compiler_params(("parallel",)),
    )(tgt, image_memory,
      p['ln2_g'].reshape(1, D), p['ln2_b'].reshape(1, D),
      ca['wq'], ca['bq'].reshape(1, D),
      ca['wkv'], ca['bkv'].reshape(1, 2 * D),
      ca['wo'], ca['bo'].reshape(1, D),
      p['gate_wt'], p['gate_wi'], p['gate_b'].reshape(1, D),
      p['gate_ln_g'].reshape(1, D), p['gate_ln_b'].reshape(1, D))


# --------------------------------------------------------------------------
# Kernel 3: feed-forward block (LN3 + Linear/GELU/Linear + residual),
#           row-tiled over B*S and k-tiled over d_hid (f32 VMEM accumulator)
# --------------------------------------------------------------------------

def _ff_block_kernel(x_ref, ln_g_ref, ln_b_ref, w1_ref, b1_ref, w2_ref, b2_ref,
                     o_ref, xn_ref, acc_ref):
    kt = pl.program_id(1)

    @pl.when(kt == 0)
    def _():
        x = x_ref[...].astype(jnp.float32)
        xn = _ln(x, ln_g_ref[...], ln_b_ref[...])
        xn_ref[...] = xn.astype(jnp.bfloat16)
        acc_ref[...] = jnp.zeros_like(acc_ref)

    h = (jnp.dot(xn_ref[...], w1_ref[...], preferred_element_type=jnp.float32)
         + b1_ref[...])
    # TODO(synk): PyTorch nn.GELU() default is erf-exact; tanh approximation used
    # here (no erf lowering in Mosaic) — max abs diff ~1e-3.
    h = jax.nn.gelu(h, approximate=True)
    acc_ref[...] += jnp.dot(h.astype(jnp.bfloat16), w2_ref[...],
                            preferred_element_type=jnp.float32)

    @pl.when(kt == pl.num_programs(1) - 1)
    def _():
        x = x_ref[...].astype(jnp.float32)
        o_ref[...] = (x + acc_ref[...] + b2_ref[...]).astype(o_ref.dtype)


def ff_block(tgt, p):
    B, S, D = tgt.shape
    Hid = p['ff_w1'].shape[1]
    N = B * S
    x = tgt.reshape(N, D)

    tm = _pick_row_tile(N)
    n_row = -(-N // tm)
    Npad = n_row * tm
    if Npad != N:                       # pad so every row tile is full & 8-aligned
        x = jnp.pad(x, ((0, Npad - N), (0, 0)))
    tk = _pick_k_tile(Hid)
    n_k = Hid // tk

    out = pl.pallas_call(
        _ff_block_kernel,
        out_shape=jax.ShapeDtypeStruct((Npad, D), x.dtype),
        grid=(n_row, n_k),
        in_specs=[
            pl.BlockSpec((tm, D), lambda i, k: (i, 0)),        # x (residual)
            pl.BlockSpec((1, D), lambda i, k: (0, 0)),         # ln3 gamma
            pl.BlockSpec((1, D), lambda i, k: (0, 0)),         # ln3 beta
            pl.BlockSpec((D, tk), lambda i, k: (0, k)),        # W1 k-tile (bf16)
            pl.BlockSpec((1, tk), lambda i, k: (0, k)),        # b1 k-tile
            pl.BlockSpec((tk, D), lambda i, k: (k, 0)),        # W2 k-tile (bf16)
            pl.BlockSpec((1, D), lambda i, k: (0, 0)),         # b2
        ],
        out_specs=pl.BlockSpec((tm, D), lambda i, k: (i, 0)),
        scratch_shapes=[pltpu.VMEM((tm, D), jnp.bfloat16),     # xn (LN output)
                        pltpu.VMEM((tm, D), jnp.float32)],     # f32 accumulator
        compiler_params=_compiler_params(("parallel", "arbitrary")),
    )(x, p['ln3_g'].reshape(1, D), p['ln3_b'].reshape(1, D),
      p['ff_w1'], p['ff_b1'].reshape(1, Hid),
      p['ff_w2'], p['ff_b2'].reshape(1, D))
    return out[:N].reshape(B, S, D)


# --------------------------------------------------------------------------
# Decoder layer / decoder
# --------------------------------------------------------------------------

def decoder_layer(tgt, image_memory, p, n_head, mask_kind):
    tgt = self_attn_block(tgt, p, n_head, mask_kind)
    if image_memory is not None:
        tgt = cross_attn_gate_block(tgt, image_memory, p, n_head)
    tgt = ff_block(tgt, p)
    return tgt


def multimodal_decoder_forward(params, tgt, image_memory, tgt_mask,
                               tgt_key_padding_mask=None, return_first_layer=False):
    # TODO(synk): tgt_key_padding_mask is not supported (call with None).
    assert tgt_key_padding_mask is None
    # TODO(synk): masks are generated in-kernel; tgt_mask is assumed to be the
    # standard generate_square_subsequent_mask(S) causal mask (or None for
    # unmasked attention) — arbitrary external masks are not streamed.
    n_head = params['n_head']
    base_kind = "none" if tgt_mask is None else "causal"

    output = tgt
    first_layer_output = None
    for li, p in enumerate(params['layers']):
        mask_kind = "local" if (return_first_layer and li == 0) else base_kind
        output = decoder_layer(output, image_memory, p, n_head, mask_kind)
        if li == 0 and return_first_layer:
            first_layer_output = output
    if return_first_layer:
        return output, first_layer_output
    return output


# --------------------------------------------------------------------------
# Deterministic parameter init (shapes from the torch module's __init__)
#   matmul weights stored in bf16 (halves weight HBM/VMEM), biases / LN in f32
# --------------------------------------------------------------------------

def init_params(key, d_model, n_head, d_hid, n_layers):
    D, Hd = d_model, d_hid
    bf16 = jnp.bfloat16

    def nrm(k, shape, scale=0.02, dtype=jnp.float32):
        return (scale * jax.random.normal(k, shape, jnp.float32)).astype(dtype)

    layers = []
    for li in range(n_layers):
        ks = jax.random.split(jax.random.fold_in(key, li), 32)
        it = iter(ks)
        sa = dict(
            wqkv=jnp.concatenate([nrm(next(it), (D, D), dtype=bf16) for _ in range(3)],
                                 axis=1),
            bqkv=nrm(next(it), (3 * D,)),
            wo=nrm(next(it), (D, D), dtype=bf16), bo=nrm(next(it), (D,)))
        ca = dict(
            wq=nrm(next(it), (D, D), dtype=bf16), bq=nrm(next(it), (D,)),
            wkv=jnp.concatenate([nrm(next(it), (D, D), dtype=bf16) for _ in range(2)],
                                axis=1),
            bkv=nrm(next(it), (2 * D,)),
            wo=nrm(next(it), (D, D), dtype=bf16), bo=nrm(next(it), (D,)))
        layers.append(dict(
            ln1_g=jnp.ones((D,), jnp.float32), ln1_b=nrm(next(it), (D,), 0.05),
            ln2_g=jnp.ones((D,), jnp.float32), ln2_b=nrm(next(it), (D,), 0.05),
            ln3_g=jnp.ones((D,), jnp.float32), ln3_b=nrm(next(it), (D,), 0.05),
            sa=sa, ca=ca,
            gate_wt=nrm(next(it), (D, D), dtype=bf16),   # gate_fc weight, text half
            gate_wi=nrm(next(it), (D, D), dtype=bf16),   # gate_fc weight, image half
            gate_b=nrm(next(it), (D,)),
            gate_ln_g=jnp.ones((D,), jnp.float32), gate_ln_b=nrm(next(it), (D,), 0.05),
            ff_w1=nrm(next(it), (D, Hd), dtype=bf16), ff_b1=nrm(next(it), (Hd,)),
            ff_w2=nrm(next(it), (Hd, D), dtype=bf16), ff_b2=nrm(next(it), (D,)),
        ))
    return dict(layers=layers, n_head=n_head)


# --------------------------------------------------------------------------
# Pure-jnp reference (f32 math, same bf16 weight values) to validate plumbing
# --------------------------------------------------------------------------

def _ref_ln(x, g, b):
    mu = x.mean(-1, keepdims=True)
    var = ((x - mu) ** 2).mean(-1, keepdims=True)
    return (x - mu) / jnp.sqrt(var + 1e-5) * g + b


def _ref_mha(xq, xkv, wq, bq, wk, bk, wv, bv, wo, bo, mask_add, n_head):
    hi = jax.lax.Precision.HIGHEST
    f32 = jnp.float32
    B, Sq, D = xq.shape
    Sk = xkv.shape[1]
    Dh = D // n_head
    q = jnp.einsum('bsd,de->bse', xq, wq.astype(f32), precision=hi) + bq
    k = jnp.einsum('bsd,de->bse', xkv, wk.astype(f32), precision=hi) + bk
    v = jnp.einsum('bsd,de->bse', xkv, wv.astype(f32), precision=hi) + bv
    q = q.reshape(B, Sq, n_head, Dh).transpose(0, 2, 1, 3)
    k = k.reshape(B, Sk, n_head, Dh).transpose(0, 2, 1, 3)
    v = v.reshape(B, Sk, n_head, Dh).transpose(0, 2, 1, 3)
    s = jnp.einsum('bhqd,bhkd->bhqk', q, k, precision=hi) / math.sqrt(Dh) + mask_add
    p = jax.nn.softmax(s, axis=-1)
    o = jnp.einsum('bhqk,bhkd->bhqd', p, v, precision=hi)
    o = o.transpose(0, 2, 1, 3).reshape(B, Sq, D)
    return jnp.einsum('bsd,de->bse', o, wo.astype(f32), precision=hi) + bo


def reference_forward(params, tgt, image_memory, tgt_mask, return_first_layer=False):
    hi = jax.lax.Precision.HIGHEST
    f32 = jnp.float32
    D = tgt.shape[-1]
    S = tgt.shape[1]
    n_head = params['n_head']
    causal_add = jnp.where(tgt_mask, _NEG_INF, 0.0).astype(f32)
    idx = jnp.arange(S)
    local_mask = (idx[None, :] > idx[:, None]) | (idx[:, None] - idx[None, :] > 2)
    local_add = jnp.where(local_mask, _NEG_INF, 0.0).astype(f32)
    cross_add = jnp.zeros((S, image_memory.shape[1]), f32)

    out = tgt
    first = None
    for li, p in enumerate(params['layers']):
        mask_add = local_add if (return_first_layer and li == 0) else causal_add
        sa, ca = p['sa'], p['ca']
        x = _ref_ln(out, p['ln1_g'], p['ln1_b'])
        out = out + _ref_mha(x, x,
                             sa['wqkv'][:, :D], sa['bqkv'][:D],
                             sa['wqkv'][:, D:2 * D], sa['bqkv'][D:2 * D],
                             sa['wqkv'][:, 2 * D:], sa['bqkv'][2 * D:],
                             sa['wo'], sa['bo'], mask_add, n_head)
        x = _ref_ln(out, p['ln2_g'], p['ln2_b'])
        cattn = _ref_mha(x, image_memory,
                         ca['wq'], ca['bq'],
                         ca['wkv'][:, :D], ca['bkv'][:D],
                         ca['wkv'][:, D:], ca['bkv'][D:],
                         ca['wo'], ca['bo'], cross_add, n_head)
        gate = jax.nn.sigmoid(
            jnp.einsum('bsd,de->bse', x, p['gate_wt'].astype(f32), precision=hi)
            + jnp.einsum('bsd,de->bse', cattn, p['gate_wi'].astype(f32), precision=hi)
            + p['gate_b'])
        fused = _ref_ln(gate * x + (1 - gate) * cattn, p['gate_ln_g'], p['gate_ln_b'])
        out = out + fused
        x = _ref_ln(out, p['ln3_g'], p['ln3_b'])
        h = jax.nn.gelu(
            jnp.einsum('bsd,dh->bsh', x, p['ff_w1'].astype(f32), precision=hi)
            + p['ff_b1'], approximate=True)
        out = out + jnp.einsum('bsh,hd->bsd', h, p['ff_w2'].astype(f32),
                               precision=hi) + p['ff_b2']
        if li == 0 and return_first_layer:
            first = out
    if return_first_layer:
        return out, first
    return out


# --------------------------------------------------------------------------

if __name__ == "__main__":
    B, S, M = 2, 8, 8
    d_model, n_head, d_hid, n_layers = 32, 4, 64, 2

    key = jax.random.PRNGKey(0)
    k_t, k_i, k_p = jax.random.split(key, 3)
    tgt = jax.random.normal(k_t, (B, S, d_model), jnp.float32)
    image_memory = jax.random.normal(k_i, (B, M, d_model), jnp.float32)
    # generate_square_subsequent_mask(S): True above the diagonal (blocked)
    tgt_mask = jnp.triu(jnp.ones((S, S), dtype=bool), k=1)

    params = init_params(k_p, d_model, n_head, d_hid, n_layers)

    # Standard causal path.
    out = multimodal_decoder_forward(params, tgt, image_memory, tgt_mask)
    out = jax.block_until_ready(out)
    ref = reference_forward(params, tgt, image_memory, tgt_mask)
    assert out.shape == (B, S, d_model)
    err = float(jnp.max(jnp.abs(out - ref)))
    assert jnp.allclose(out, ref, atol=2e-2, rtol=2e-2), f"max abs diff {err}"

    # return_first_layer path (local window mask in layer 0).
    out2, first2 = multimodal_decoder_forward(params, tgt, image_memory, tgt_mask,
                                              return_first_layer=True)
    out2 = jax.block_until_ready(out2)
    ref2, ref_first2 = reference_forward(params, tgt, image_memory, tgt_mask,
                                         return_first_layer=True)
    err2 = float(jnp.max(jnp.abs(out2 - ref2)))
    errf = float(jnp.max(jnp.abs(first2 - ref_first2)))
    assert jnp.allclose(out2, ref2, atol=2e-2, rtol=2e-2), f"max abs diff {err2}"
    assert jnp.allclose(first2, ref_first2, atol=2e-2, rtol=2e-2), f"max abs diff {errf}"

    print("KERNEL_OK")
</pallas_src>

<mosaic_0001>
module attributes {stable_mosaic.version = 11 : i64} {
  func.func @_self_block_kernel(%arg0: i32, %arg1: memref<1x8x32xf32, #tpu.memory_space<vmem>>, %arg2: memref<1x32xf32, #tpu.memory_space<vmem>>, %arg3: memref<1x32xf32, #tpu.memory_space<vmem>>, %arg4: memref<32x96xbf16, #tpu.memory_space<vmem>>, %arg5: memref<1x96xf32, #tpu.memory_space<vmem>>, %arg6: memref<32x32xbf16, #tpu.memory_space<vmem>>, %arg7: memref<1x32xf32, #tpu.memory_space<vmem>>, %arg8: memref<1x8x32xf32, #tpu.memory_space<vmem>>, %arg9: memref<8x32xbf16, #tpu.memory_space<vmem>>) attributes {dimension_semantics = [#tpu.dimension_semantics<parallel>], iteration_bounds = array<i64: 2>, scalar_prefetch = 0 : i64, scratch_operands = 1 : i64, tpu.core_type = #tpu.core_type<tc>, window_params = [{transform_indices = @transform_0, window_bounds = array<i64: 1, 8, 32>}, {pipeline_mode = #tpu.pipeline_mode<synchronous>, transform_indices = @transform_1, window_bounds = array<i64: 1, 32>}, {pipeline_mode = #tpu.pipeline_mode<synchronous>, transform_indices = @transform_2, window_bounds = array<i64: 1, 32>}, {pipeline_mode = #tpu.pipeline_mode<synchronous>, transform_indices = @transform_3, window_bounds = array<i64: 32, 96>}, {pipeline_mode = #tpu.pipeline_mode<synchronous>, transform_indices = @transform_4, window_bounds = array<i64: 1, 96>}, {pipeline_mode = #tpu.pipeline_mode<synchronous>, transform_indices = @transform_5, window_bounds = array<i64: 32, 32>}, {pipeline_mode = #tpu.pipeline_mode<synchronous>, transform_indices = @transform_6, window_bounds = array<i64: 1, 32>}, {transform_indices = @transform_7, window_bounds = array<i64: 1, 8, 32>}]} {
    %c0 = arith.constant 0 : index
    %c0_0 = arith.constant 0 : index
    %c0_1 = arith.constant 0 : index
    %0 = vector.load %arg1[%c0, %c0_0, %c0_1] : memref<1x8x32xf32, #tpu.memory_space<vmem>>, vector<1x8x32xf32>
    %1 = vector.shape_cast %0 : vector<1x8x32xf32> to vector<8x32xf32>
    %c0_2 = arith.constant 0 : index
    %c0_3 = arith.constant 0 : index
    %2 = vector.load %arg2[%c0_2, %c0_3] : memref<1x32xf32, #tpu.memory_space<vmem>>, vector<1x32xf32>
    %c0_4 = arith.constant 0 : index
    %c0_5 = arith.constant 0 : index
    %3 = vector.load %arg3[%c0_4, %c0_5] : memref<1x32xf32, #tpu.memory_space<vmem>>, vector<1x32xf32>
    %cst = arith.constant dense<0.000000e+00> : vector<8xf32>
    %4 = vector.multi_reduction <add>, %1, %cst [1] : vector<8x32xf32> to vector<8xf32>
    %5 = vector.shape_cast %4 : vector<8xf32> to vector<8x1xf32>
    %cst_6 = arith.constant 3.200000e+01 : f32
    %6 = vector.broadcast %cst_6 : f32 to vector<8x1xf32>
    %7 = arith.divf %5, %6 : vector<8x1xf32>
    %8 = vector.broadcast %7 : vector<8x1xf32> to vector<8x32xf32>
    %9 = arith.subf %1, %8 : vector<8x32xf32>
    %10 = arith.mulf %9, %9 : vector<8x32xf32>
    %cst_7 = arith.constant dense<0.000000e+00> : vector<8xf32>
    %11 = vector.multi_reduction <add>, %10, %cst_7 [1] : vector<8x32xf32> to vector<8xf32>
    %12 = vector.shape_cast %11 : vector<8xf32> to vector<8x1xf32>
    %cst_8 = arith.constant 3.200000e+01 : f32
    %13 = vector.broadcast %cst_8 : f32 to vector<8x1xf32>
    %14 = arith.divf %12, %13 : vector<8x1xf32>
    %15 = vector.broadcast %7 : vector<8x1xf32> to vector<8x32xf32>
    %16 = arith.subf %1, %15 : vector<8x32xf32>
    %cst_9 = arith.constant 9.99999974E-6 : f32
    %17 = vector.broadcast %cst_9 : f32 to vector<8x1xf32>
    %18 = arith.addf %14, %17 : vector<8x1xf32>
    %19 = math.rsqrt %18 : vector<8x1xf32>
    %20 = vector.broadcast %19 : vector<8x1xf32> to vector<8x32xf32>
    %21 = arith.mulf %16, %20 : vector<8x32xf32>
    %22 = vector.broadcast %2 : vector<1x32xf32> to vector<8x32xf32>
    %23 = arith.mulf %21, %22 : vector<8x32xf32>
    %24 = vector.broadcast %3 : vector<1x32xf32> to vector<8x32xf32>
    %25 = arith.addf %23, %24 : vector<8x32xf32>
    %26 = arith.truncf %25 : vector<8x32xf32> to vector<8x32xbf16>
    %c0_10 = arith.constant 0 : index
    %c0_11 = arith.constant 0 : index
    %27 = vector.load %arg4[%c0_10, %c0_11] : memref<32x96xbf16, #tpu.memory_space<vmem>>, vector<32x96xbf16>
    %cst_12 = arith.constant dense<0.000000e+00> : vector<8x96xf32>
    %28 = tpu.matmul %26, %27, %cst_12 {dimension_numbers = #tpu.dot_dimension_numbers<[1], [0], [0], [1], [0, 0, 1, 1], [], []>} : vector<8x32xbf16>, vector<32x96xbf16>, vector<8x96xf32> -> vector<8x96xf32>
    %c0_13 = arith.constant 0 : index
    %c0_14 = arith.constant 0 : index
    %29 = vector.load %arg5[%c0_13, %c0_14] : memref<1x96xf32, #tpu.memory_space<vmem>>, vector<1x96xf32>
    %30 = vector.broadcast %29 : vector<1x96xf32> to vector<8x96xf32>
    %31 = arith.addf %28, %30 : vector<8x96xf32>
    %32 = vector.extract_strided_slice %31 {offsets = [0, 0], sizes = [8, 32], strides = [1, 1]} : vector<8x96xf32> to vector<8x32xf32>
    %33 = vector.extract_strided_slice %31 {offsets = [0, 32], sizes = [8, 32], strides = [1, 1]} : vector<8x96xf32> to vector<8x32xf32>
    %34 = arith.truncf %33 : vector<8x32xf32> to vector<8x32xbf16>
    %35 = vector.extract_strided_slice %31 {offsets = [0, 64], sizes = [8, 32], strides = [1, 1]} : vector<8x96xf32> to vector<8x32xf32>
    %36 = arith.truncf %35 : vector<8x32xf32> to vector<8x32xbf16>
    %37 = tpu.iota {dimensions = array<i32: 0>} : vector<8x8xi32>
    %38 = tpu.iota {dimensions = array<i32: 1>} : vector<8x8xi32>
    %39 = arith.cmpi sgt, %38, %37 : vector<8x8xi32>
    %cst_15 = arith.constant -1.000000e+30 : f32
    %cst_16 = arith.constant 0.000000e+00 : f32
    %40 = vector.broadcast %cst_15 : f32 to vector<8x8xf32>
    %41 = vector.broadcast %cst_16 : f32 to vector<8x8xf32>
    %42 = arith.select %39, %40, %41 : vector<8x8xi1>, vector<8x8xf32>
    %43 = vector.extract_strided_slice %32 {offsets = [0, 0], sizes = [8, 8], strides = [1, 1]} : vector<8x32xf32> to vector<8x8xf32>
    %cst_17 = arith.constant 0.353553385 : f32
    %44 = vector.broadcast %cst_17 : f32 to vector<8x8xf32>
    %45 = arith.mulf %43, %44 : vector<8x8xf32>
    %46 = arith.truncf %45 : vector<8x8xf32> to vector<8x8xbf16>
    %47 = vector.extract_strided_slice %34 {offsets = [0, 0], sizes = [8, 8], strides = [1, 1]} : vector<8x32xbf16> to vector<8x8xbf16>
    %cst_18 = arith.constant dense<0.000000e+00> : vector<8x8xf32>
    %48 = tpu.matmul %46, %47, %cst_18 {dimension_numbers = #tpu.dot_dimension_numbers<[1], [1], [0], [0], [0, 0, 1, 0], [], []>} : vector<8x8xbf16>, vector<8x8xbf16>, vector<8x8xf32> -> vector<8x8xf32>
    %49 = arith.addf %48, %42 : vector<8x8xf32>
    %cst_19 = arith.constant dense<0xFF800000> : vector<8xf32>
    %50 = vector.multi_reduction <maximumf>, %49, %cst_19 [1] : vector<8x8xf32> to vector<8xf32>
    %51 = vector.shape_cast %50 : vector<8xf32> to vector<8x1xf32>
    %52 = vector.broadcast %51 : vector<8x1xf32> to vector<8x8xf32>
    %53 = arith.subf %49, %52 : vector<8x8xf32>
    %54 = math.exp %53 : vector<8x8xf32>
    %cst_20 = arith.constant dense<0.000000e+00> : vector<8xf32>
    %55 = vector.multi_reduction <add>, %54, %cst_20 [1] : vector<8x8xf32> to vector<8xf32>
    %56 = vector.shape_cast %55 : vector<8xf32> to vector<8x1xf32>
    %57 = tpu.reciprocal %56 {approx = true} : vector<8x1xf32> -> vector<8x1xf32>
    %58 = vector.broadcast %57 : vector<8x1xf32> to vector<8x8xf32>
    %59 = arith.mulf %54, %58 : vector<8x8xf32>
    %60 = arith.truncf %59 : vector<8x8xf32> to vector<8x8xbf16>
    %61 = vector.extract_strided_slice %36 {offsets = [0, 0], sizes = [8, 8], strides = [1, 1]} : vector<8x32xbf16> to vector<8x8xbf16>
    %cst_21 = arith.constant dense<0.000000e+00> : vector<8x8xf32>
    %62 = tpu.matmul %60, %61, %cst_21 {dimension_numbers = #tpu.dot_dimension_numbers<[1], [0], [0], [1], [0, 0, 1, 1], [], []>} : vector<8x8xbf16>, vector<8x8xbf16>, vector<8x8xf32> -> vector<8x8xf32>
    %63 = arith.truncf %62 : vector<8x8xf32> to vector<8x8xbf16>
    %c0_22 = arith.constant 0 : index
    %c0_23 = arith.constant 0 : index
    %64 = vector.load %arg9[%c0_22, %c0_23] : memref<8x32xbf16, #tpu.memory_space<vmem>>, vector<8x8xbf16>
    tpu.vector_store %arg9[%c0_22, %c0_23], %63 {strides = array<i32>} : memref<8x32xbf16, #tpu.memory_space<vmem>>, vector<8x8xbf16>,
    %65 = vector.extract_strided_slice %32 {offsets = [0, 8], sizes = [8, 8], strides = [1, 1]} : vector<8x32xf32> to vector<8x8xf32>
    %cst_24 = arith.constant 0.353553385 : f32
    %66 = vector.broadcast %cst_24 : f32 to vector<8x8xf32>
    %67 = arith.mulf %65, %66 : vector<8x8xf32>
    %68 = arith.truncf %67 : vector<8x8xf32> to vector<8x8xbf16>
    %69 = vector.extract_strided_slice %34 {offsets = [0, 8], sizes = [8, 8], strides = [1, 1]} : vector<8x32xbf16> to vector<8x8xbf16>
    %cst_25 = arith.constant dense<0.000000e+00> : vector<8x8xf32>
    %70 = tpu.matmul %68, %69, %cst_25 {dimension_numbers = #tpu.dot_dimension_numbers<[1], [1], [0], [0], [0, 0, 1, 0], [], []>} : vector<8x8xbf16>, vector<8x8xbf16>, vector<8x8xf32> -> vector<8x8xf32>
    %71 = arith.addf %70, %42 : vector<8x8xf32>
    %cst_26 = arith.constant dense<0xFF800000> : vector<8xf32>
    %72 = vector.multi_reduction <maximumf>, %71, %cst_26 [1] : vector<8x8xf32> to vector<8xf32>
    %73 = vector.shape_cast %72 : vector<8xf32> to vector<8x1xf32>
    %74 = vector.broadcast %73 : vector<8x1xf32> to vector<8x8xf32>
    %75 = arith.subf %71, %74 : vector<8x8xf32>
    %76 = math.exp %75 : vector<8x8xf32>
    %cst_27 = arith.constant dense<0.000000e+00> : vector<8xf32>
    %77 = vector.multi_reduction <add>, %76, %cst_27 [1] : vector<8x8xf32> to vector<8xf32>
    %78 = vector.shape_cast %77 : vector<8xf32> to vector<8x1xf32>
    %79 = tpu.reciprocal %78 {approx = true} : vector<8x1xf32> -> vector<8x1xf32>
    %80 = vector.broadcast %79 : vector<8x1xf32> to vector<8x8xf32>
    %81 = arith.mulf %76, %80 : vector<8x8xf32>
    %82 = arith.truncf %81 : vector<8x8xf32> to vector<8x8xbf16>
    %83 = vector.extract_strided_slice %36 {offsets = [0, 8], sizes = [8, 8], strides = [1, 1]} : vector<8x32xbf16> to vector<8x8xbf16>
    %cst_28 = arith.constant dense<0.000000e+00> : vector<8x8xf32>
    %84 = tpu.matmul %82, %83, %cst_28 {dimension_numbers = #tpu.dot_dimension_numbers<[1], [0], [0], [1], [0, 0, 1, 1], [], []>} : vector<8x8xbf16>, vector<8x8xbf16>, vector<8x8xf32> -> vector<8x8xf32>
    %85 = arith.truncf %84 : vector<8x8xf32> to vector<8x8xbf16>
    %c0_29 = arith.constant 0 : index
    %c8 = arith.constant 8 : index
    %86 = vector.load %arg9[%c0_29, %c8] : memref<8x32xbf16, #tpu.memory_space<vmem>>, vector<8x8xbf16>
    tpu.vector_store %arg9[%c0_29, %c8], %85 {strides = array<i32>} : memref<8x32xbf16, #tpu.memory_space<vmem>>, vector<8x8xbf16>,
    %87 = vector.extract_strided_slice %32 {offsets = [0, 16], sizes = [8, 8], strides = [1, 1]} : vector<8x32xf32> to vector<8x8xf32>
    %cst_30 = arith.constant 0.353553385 : f32
    %88 = vector.broadcast %cst_30 : f32 to vector<8x8xf32>
    %89 = arith.mulf %87, %88 : vector<8x8xf32>
    %90 = arith.truncf %89 : vector<8x8xf32> to vector<8x8xbf16>
    %91 = vector.extract_strided_slice %34 {offsets = [0, 16], sizes = [8, 8], strides = [1, 1]} : vector<8x32xbf16> to vector<8x8xbf16>
    %cst_31 = arith.constant dense<0.000000e+00> : vector<8x8xf32>
    %92 = tpu.matmul %90, %91, %cst_31 {dimension_numbers = #tpu.dot_dimension_numbers<[1], [1], [0], [0], [0, 0, 1, 0], [], []>} : vector<8x8xbf16>, vector<8x8xbf16>, vector<8x8xf32> -> vector<8x8xf32>
    %93 = arith.addf %92, %42 : vector<8x8xf32>
    %cst_32 = arith.constant dense<0xFF800000> : vector<8xf32>
    %94 = vector.multi_reduction <maximumf>, %93, %cst_32 [1] : vector<8x8xf32> to vector<8xf32>
    %95 = vector.shape_cast %94 : vector<8xf32> to vector<8x1xf32>
    %96 = vector.broadcast %95 : vector<8x1xf32> to vector<8x8xf32>
    %97 = arith.subf %93, %96 : vector<8x8xf32>
    %98 = math.exp %97 : vector<8x8xf32>
    %cst_33 = arith.constant dense<0.000000e+00> : vector<8xf32>
    %99 = vector.multi_reduction <add>, %98, %cst_33 [1] : vector<8x8xf32> to vector<8xf32>
    %100 = vector.shape_cast %99 : vector<8xf32> to vector<8x1xf32>
    %101 = tpu.reciprocal %100 {approx = true} : vector<8x1xf32> -> vector<8x1xf32>
    %102 = vector.broadcast %101 : vector<8x1xf32> to vector<8x8xf32>
    %103 = arith.mulf %98, %102 : vector<8x8xf32>
    %104 = arith.truncf %103 : vector<8x8xf32> to vector<8x8xbf16>
    %105 = vector.extract_strided_slice %36 {offsets = [0, 16], sizes = [8, 8], strides = [1, 1]} : vector<8x32xbf16> to vector<8x8xbf16>
    %cst_34 = arith.constant dense<0.000000e+00> : vector<8x8xf32>
    %106 = tpu.matmul %104, %105, %cst_34 {dimension_numbers = #tpu.dot_dimension_numbers<[1], [0], [0], [1], [0, 0, 1, 1], [], []>} : vector<8x8xbf16>, vector<8x8xbf16>, vector<8x8xf32> -> vector<8x8xf32>
    %107 = arith.truncf %106 : vector<8x8xf32> to vector<8x8xbf16>
    %c0_35 = arith.constant 0 : index
    %c16 = arith.constant 16 : index
    %108 = vector.load %arg9[%c0_35, %c16] : memref<8x32xbf16, #tpu.memory_space<vmem>>, vector<8x8xbf16>
    tpu.vector_store %arg9[%c0_35, %c16], %107 {strides = array<i32>} : memref<8x32xbf16, #tpu.memory_space<vmem>>, vector<8x8xbf16>,
    %109 = vector.extract_strided_slice %32 {offsets = [0, 24], sizes = [8, 8], strides = [1, 1]} : vector<8x32xf32> to vector<8x8xf32>
    %cst_36 = arith.constant 0.353553385 : f32
    %110 = vector.broadcast %cst_36 : f32 to vector<8x8xf32>
    %111 = arith.mulf %109, %110 : vector<8x8xf32>
    %112 = arith.truncf %111 : vector<8x8xf32> to vector<8x8xbf16>
    %113 = vector.extract_strided_slice %34 {offsets = [0, 24], sizes = [8, 8], strides = [1, 1]} : vector<8x32xbf16> to vector<8x8xbf16>
    %cst_37 = arith.constant dense<0.000000e+00> : vector<8x8xf32>
    %114 = tpu.matmul %112, %113, %cst_37 {dimension_numbers = #tpu.dot_dimension_numbers<[1], [1], [0], [0], [0, 0, 1, 0], [], []>} : vector<8x8xbf16>, vector<8x8xbf16>, vector<8x8xf32> -> vector<8x8xf32>
    %115 = arith.addf %114, %42 : vector<8x8xf32>
    %cst_38 = arith.constant dense<0xFF800000> : vector<8xf32>
    %116 = vector.multi_reduction <maximumf>, %115, %cst_38 [1] : vector<8x8xf32> to vector<8xf32>
    %117 = vector.shape_cast %116 : vector<8xf32> to vector<8x1xf32>
    %118 = vector.broadcast %117 : vector<8x1xf32> to vector<8x8xf32>
    %119 = arith.subf %115, %118 : vector<8x8xf32>
    %120 = math.exp %119 : vector<8x8xf32>
    %cst_39 = arith.constant dense<0.000000e+00> : vector<8xf32>
    %121 = vector.multi_reduction <add>, %120, %cst_39 [1] : vector<8x8xf32> to vector<8xf32>
    %122 = vector.shape_cast %121 : vector<8xf32> to vector<8x1xf32>
    %123 = tpu.reciprocal %122 {approx = true} : vector<8x1xf32> -> vector<8x1xf32>
    %124 = vector.broadcast %123 : vector<8x1xf32> to vector<8x8xf32>
    %125 = arith.mulf %120, %124 : vector<8x8xf32>
    %126 = arith.truncf %125 : vector<8x8xf32> to vector<8x8xbf16>
    %127 = vector.extract_strided_slice %36 {offsets = [0, 24], sizes = [8, 8], strides = [1, 1]} : vector<8x32xbf16> to vector<8x8xbf16>
    %cst_40 = arith.constant dense<0.000000e+00> : vector<8x8xf32>
    %128 = tpu.matmul %126, %127, %cst_40 {dimension_numbers = #tpu.dot_dimension_numbers<[1], [0], [0], [1], [0, 0, 1, 1], [], []>} : vector<8x8xbf16>, vector<8x8xbf16>, vector<8x8xf32> -> vector<8x8xf32>
    %129 = arith.truncf %128 : vector<8x8xf32> to vector<8x8xbf16>
    %c0_41 = arith.constant 0 : index
    %c24 = arith.constant 24 : index
    %130 = vector.load %arg9[%c0_41, %c24] : memref<8x32xbf16, #tpu.memory_space<vmem>>, vector<8x8xbf16>
    tpu.vector_store %arg9[%c0_41, %c24], %129 {strides = array<i32>} : memref<8x32xbf16, #tpu.memory_space<vmem>>, vector<8x8xbf16>,
    %c0_42 = arith.constant 0 : index
    %c0_43 = arith.constant 0 : index
    %131 = vector.load %arg9[%c0_42, %c0_43] : memref<8x32xbf16, #tpu.memory_space<vmem>>, vector<8x32xbf16>
    %c0_44 = arith.constant 0 : index
    %c0_45 = arith.constant 0 : index
    %132 = vector.load %arg6[%c0_44, %c0_45] : memref<32x32xbf16, #tpu.memory_space<vmem>>, vector<32x32xbf16>
    %cst_46 = arith.constant dense<0.000000e+00> : vector<8x32xf32>
    %133 = tpu.matmul %131, %132, %cst_46 {dimension_numbers = #tpu.dot_dimension_numbers<[1], [0], [0], [1], [0, 0, 1, 1], [], []>} : vector<8x32xbf16>, vector<32x32xbf16>, vector<8x32xf32> -> vector<8x32xf32>
    %c0_47 = arith.constant 0 : index
    %c0_48 = arith.constant 0 : index
    %134 = vector.load %arg7[%c0_47, %c0_48] : memref<1x32xf32, #tpu.memory_space<vmem>>, vector<1x32xf32>
    %135 = vector.broadcast %134 : vector<1x32xf32> to vector<8x32xf32>
    %136 = arith.addf %133, %135 : vector<8x32xf32>
    %137 = arith.addf %1, %136 : vector<8x32xf32>
    %c0_49 = arith.constant 0 : index
    %c0_50 = arith.constant 0 : index
    %c0_51 = arith.constant 0 : index
    %138 = vector.load %arg8[%c0_49, %c0_50, %c0_51] : memref<1x8x32xf32, #tpu.memory_space<vmem>>, vector<1x8x32xf32>
    %139 = vector.shape_cast %138 : vector<1x8x32xf32> to vector<8x32xf32>
    %140 = vector.shape_cast %137 : vector<8x32xf32> to vector<1x8x32xf32>
    tpu.vector_store %arg8[%c0_49, %c0_50, %c0_51], %140 {strides = array<i32>} : memref<1x8x32xf32, #tpu.memory_space<vmem>>, vector<1x8x32xf32>,
    return
  }
  func.func @transform_0(%arg0: i32) -> (i32, i32, i32) {
    %c0_i32 = arith.constant 0 : i32
    %c0_i32_0 = arith.constant 0 : i32
    %c0_i32_1 = arith.constant 0 : i32
    return %arg0, %c0_i32, %c0_i32_0 : i32, i32, i32
  }
  func.func @transform_1(%arg0: i32) -> (i32, i32) {
    %c0_i32 = arith.constant 0 : i32
    %c0_i32_0 = arith.constant 0 : i32
    %c0_i32_1 = arith.constant 0 : i32
    return %c0_i32, %c0_i32_0 : i32, i32
  }
  func.func @transform_2(%arg0: i32) -> (i32, i32) {
    %c0_i32 = arith.constant 0 : i32
    %c0_i32_0 = arith.constant 0 : i32
    %c0_i32_1 = arith.constant 0 : i32
    return %c0_i32, %c0_i32_0 : i32, i32
  }
  func.func @transform_3(%arg0: i32) -> (i32, i32) {
    %c0_i32 = arith.constant 0 : i32
    %c0_i32_0 = arith.constant 0 : i32
    %c0_i32_1 = arith.constant 0 : i32
    return %c0_i32, %c0_i32_0 : i32, i32
  }
  func.func @transform_4(%arg0: i32) -> (i32, i32) {
    %c0_i32 = arith.constant 0 : i32
    %c0_i32_0 = arith.constant 0 : i32
    %c0_i32_1 = arith.constant 0 : i32
    return %c0_i32, %c0_i32_0 : i32, i32
  }
  func.func @transform_5(%arg0: i32) -> (i32, i32) {
    %c0_i32 = arith.constant 0 : i32
    %c0_i32_0 = arith.constant 0 : i32
    %c0_i32_1 = arith.constant 0 : i32
    return %c0_i32, %c0_i32_0 : i32, i32
  }
  func.func @transform_6(%arg0: i32) -> (i32, i32) {
    %c0_i32 = arith.constant 0 : i32
    %c0_i32_0 = arith.constant 0 : i32
    %c0_i32_1 = arith.constant 0 : i32
    return %c0_i32, %c0_i32_0 : i32, i32
  }
  func.func @transform_7(%arg0: i32) -> (i32, i32, i32) {
    %c0_i32 = arith.constant 0 : i32
    %c0_i32_0 = arith.constant 0 : i32
    %c0_i32_1 = arith.constant 0 : i32
    return %arg0, %c0_i32, %c0_i32_0 : i32, i32, i32
  }
}

</mosaic_0001>

<llo_original>
// kernel: tpu_custom_call.1
$region0: #{tpu_custom_call.1}
  #allocation0 [shape = 'u32[]', space=smem, size = 0x4, offset = 0x4, fixed_abs, tag = 'smem constant byte address 0x4 - core index']
  #allocation1 [shape = 'u32[72,128]{1,0:T(1,128)}', space=vmem, size = 0x9000, scoped, tag = 'internal scratch']
  #allocation2 [shape = 'bf16[8,32]{1,0:T(8,128)(2,1)}', space=vmem, size = 0x800, scoped, tag = 'scratch operand']
  %s0 = inlined_call_operand.hbm [shape: f32[2,8,32], index: 0, kind: input, shape index: {}]
  %s1 = inlined_call_operand.hbm [shape: f32[1,32], index: 1, kind: input, shape index: {}]
  %s2 = inlined_call_operand.vmem [shape: f32[1,32], index: 2, kind: input, shape index: {}]
  %s3 = inlined_call_operand.hbm [shape: bf16[32,96], index: 3, kind: input, shape index: {}]
  %s4 = inlined_call_operand.vmem [shape: f32[1,96], index: 4, kind: input, shape index: {}]
  %s5 = inlined_call_operand.hbm [shape: bf16[32,32], index: 5, kind: input, shape index: {}]
  %s6 = inlined_call_operand.vmem [shape: f32[1,32], index: 6, kind: input, shape index: {}]
  %s7 = inlined_call_operand.hbm [shape: f32[2,8,32], index: 7, kind: output, shape index: {}]
  %s8 = sld [smem:[#allocation0]]
  $region77: #{tpu_custom_call.1} parent=0
    _
  %s10 = ssub.s32 1, %s8
  %s11 = scalar_select 0, %s10, %s8
  $region1: #{tpu_custom_call.1} parent=0
    #allocation3 [shape = 'u8[8192]{0}', space=vmem, size = 0x2000, scoped, tag = 'input window, operand 0']
    #allocation4 [shape = 's32[2]{0}', space=sflag, size = 0x8, scoped, tag = 'scoped memory for tpu_custom_call.1']
    #allocation5 [shape = 's32[2]{0}', space=sflag, size = 0x8, scoped, tag = 'scoped memory for tpu_custom_call.1']
    #allocation6 [shape = 'u8[512]{0}', space=vmem, size = 0x400, scoped, tag = 'input window, operand 1, single buffered']
    #allocation7 [shape = 's32[1]{0}', space=sflag, size = 0x4, scoped, tag = 'scoped memory for tpu_custom_call.1']
    #allocation8 [shape = 'u8[8192]{0}', space=vmem, size = 0x2000, scoped, tag = 'input window, operand 3, single buffered']
    #allocation9 [shape = 'u8[8192]{0}', space=vmem, size = 0x2000, scoped, tag = 'input window, operand 5, single buffered']
    #allocation10 [shape = 's32[1]{0}', space=sflag, size = 0x4, scoped, tag = 'scoped memory for tpu_custom_call.1']
    #allocation11 [shape = 'u8[8192]{0}', space=vmem, size = 0x2000, scoped, tag = 'output window, operand 0']
    %12 = vsyncpa [#allocation4], 0
    %s13 = scalar_lea.sflag [#allocation4], 1
    %14 = vsyncpa %s13, 0
    %15 = vsyncpa [#allocation7], 0
    %16 = vsyncpa [#allocation10], 0
    %17 = vsyncpa [#allocation5], 0
    %s18 = scalar_lea.sflag [#allocation5], 1
    %19 = vsyncpa %s18, 0
    loop: start=0, step=1, limit=4
    $region2: #{tpu_custom_call.1} parent=1 // loop_pre_header
      _
    $region3: #{tpu_custom_call.1} parent=1 // loop_header
      %s21 = sphi 0, %s25
      %p22 = scmp.ge.s32.totalorder %s21, 4
      %s31 = sphi 0, %s33
      %s34 = sphi 0, %s31
      %s35 = sphi 0, %s34
      %s51 = sphi 0, %s35
      %s55 = sphi 0, %s55
      %s57 = sphi 0, %s55
      %s58 = sphi 0, %s57
      %s72 = sphi 0, %s58
      %s76 = sphi 0, %s76
      %s78 = sphi 0, %s76
      %s79 = sphi 0, %s78
      %s93 = sphi 0, %s79
      %s97 = sphi 0, %s97
      %s99 = sphi 0, %s97
      %s100 = sphi 0, %s99
      %s114 = sphi 0, %s100
      %s118 = sphi 0, %s118
      %s120 = sphi 0, %s118
      %s121 = sphi 0, %s120
      %s135 = sphi 0, %s121
      %s139 = sphi 0, %s139
      %s141 = sphi 0, %s139
      %s142 = sphi 0, %s141
      %s156 = sphi 0, %s142
      %s160 = sphi 0, %s160
      %s162 = sphi 0, %s160
      %s163 = sphi 0, %s162
      %s177 = sphi 0, %s163
      %s183 = sphi 0, %s185
      %s186 = sphi 0, %s183
      %s187 = sphi 0, %s186
      %s203 = sphi 0, %s187
    $region4: #{tpu_custom_call.1} parent=1 // loop_header_branch
      %24 = sbr.rel (%p22) target = $region8
    $region5: #{tpu_custom_call.1} parent=1 // loop_body
      %s26 = ssub.s32 %s21, 1
      %s27 = ssub.s32 %s21, 2
      %s28 = sadd.s32 %s21, 1
      %s29 = ssub.s32 %s21, %s28
      %p30 = scmp.eq.s32.totalorder %s29, 0
      %s32 = sadd.s32 %s31, 1
      %s33 = scalar_select %p30, %s31, %s32
      %p36 = pneg %p30
      %p37 = scmp.eq.s32.totalorder %s21, 1
      %p38 = por %p36, %p37
      %p39 = scmp.ne.s32.totalorder %s31, %s34
      %p40 = scmp.eq.s32.totalorder %s21, 0
      %p41 = por %p39, %p40
      %p42 = scmp.ne.s32.totalorder %s31, %s34
      %p43 = scmp.eq.s32.totalorder %s26, 1
      %p44 = por %p42, %p43
      %p45 = scmp.ne.s32.totalorder %s34, %s35
      %p46 = scmp.eq.s32.totalorder %s26, 0
      %p47 = por %p45, %p46
      %p48 = scmp.ne.s32.totalorder %s34, %s35
      %p49 = scmp.eq.s32.totalorder %s27, 1
      %p50 = por %p48, %p49
      %p52 = scmp.ne.s32.totalorder %s35, %s51
      %p53 = scmp.eq.s32.totalorder %s27, 0
      %p54 = por %p52, %p53
      %s56 = sadd.s32 %s55, 1
      %p59 = scmp.eq.s32.totalorder %s21, 1
      %p60 = scmp.ne.s32.totalorder %s55, %s57
      %p61 = scmp.eq.s32.totalorder %s21, 0
      %p62 = por %p60, %p61
      %p63 = scmp.ne.s32.totalorder %s55, %s57
      %p64 = scmp.eq.s32.totalorder %s26, 1
      %p65 = por %p63, %p64
      %p66 = scmp.ne.s32.totalorder %s57, %s58
      %p67 = scmp.eq.s32.totalorder %s26, 0
      %p68 = por %p66, %p67
      %p69 = scmp.ne.s32.totalorder %s57, %s58
      %p70 = scmp.eq.s32.totalorder %s27, 1
      %p71 = por %p69, %p70
      %p73 = scmp.ne.s32.totalorder %s58, %s72
      %p74 = scmp.eq.s32.totalorder %s27, 0
      %p75 = por %p73, %p74
      %s77 = sadd.s32 %s76, 1
      %p80 = scmp.eq.s32.totalorder %s21, 1
      %p81 = scmp.ne.s32.totalorder %s76, %s78
      %p82 = scmp.eq.s32.totalorder %s21, 0
      %p83 = por %p81, %p82
      %p84 = scmp.ne.s32.totalorder %s76, %s78
      %p85 = scmp.eq.s32.totalorder %s26, 1
      %p86 = por %p84, %p85
      %p87 = scmp.ne.s32.totalorder %s78, %s79
      %p88 = scmp.eq.s32.totalorder %s26, 0
      %p89 = por %p87, %p88
      %p90 = scmp.ne.s32.totalorder %s78, %s79
      %p91 = scmp.eq.s32.totalorder %s27, 1
      %p92 = por %p90, %p91
      %p94 = scmp.ne.s32.totalorder %s79, %s93
      %p95 = scmp.eq.s32.totalorder %s27, 0
      %p96 = por %p94, %p95
      %s98 = sadd.s32 %s97, 1
      %p101 = scmp.eq.s32.totalorder %s21, 1
      %p102 = scmp.ne.s32.totalorder %s97, %s99
      %p103 = scmp.eq.s32.totalorder %s21, 0
      %p104 = por %p102, %p103
      %p105 = scmp.ne.s32.totalorder %s97, %s99
      %p106 = scmp.eq.s32.totalorder %s26, 1
      %p107 = por %p105, %p106
      %p108 = scmp.ne.s32.totalorder %s99, %s100
      %p109 = scmp.eq.s32.totalorder %s26, 0
      %p110 = por %p108, %p109
      %p111 = scmp.ne.s32.totalorder %s99, %s100
      %p112 = scmp.eq.s32.totalorder %s27, 1
      %p113 = por %p111, %p112
      %p115 = scmp.ne.s32.totalorder %s100, %s114
      %p116 = scmp.eq.s32.totalorder %s27, 0
      %p117 = por %p115, %p116
      %s119 = sadd.s32 %s118, 1
      %p122 = scmp.eq.s32.totalorder %s21, 1
      %p123 = scmp.ne.s32.totalorder %s118, %s120
      %p124 = scmp.eq.s32.totalorder %s21, 0
      %p125 = por %p123, %p124
      %p126 = scmp.ne.s32.totalorder %s118, %s120
      %p127 = scmp.eq.s32.totalorder %s26, 1
      %p128 = por %p126, %p127
      %p129 = scmp.ne.s32.totalorder %s120, %s121
      %p130 = scmp.eq.s32.totalorder %s26, 0
      %p131 = por %p129, %p130
      %p132 = scmp.ne.s32.totalorder %s120, %s121
      %p133 = scmp.eq.s32.totalorder %s27, 1
      %p134 = por %p132, %p133
      %p136 = scmp.ne.s32.totalorder %s121, %s135
      %p137 = scmp.eq.s32.totalorder %s27, 0
      %p138 = por %p136, %p137
      %s140 = sadd.s32 %s139, 1
      %p143 = scmp.eq.s32.totalorder %s21, 1
      %p144 = scmp.ne.s32.totalorder %s139, %s141
      %p145 = scmp.eq.s32.totalorder %s21, 0
      %p146 = por %p144, %p145
      %p147 = scmp.ne.s32.totalorder %s139, %s141
      %p148 = scmp.eq.s32.totalorder %s26, 1
      %p149 = por %p147, %p148
      %p150 = scmp.ne.s32.totalorder %s141, %s142
      %p151 = scmp.eq.s32.totalorder %s26, 0
      %p152 = por %p150, %p151
      %p153 = scmp.ne.s32.totalorder %s141, %s142
      %p154 = scmp.eq.s32.totalorder %s27, 1
      %p155 = por %p153, %p154
      %p157 = scmp.ne.s32.totalorder %s142, %s156
      %p158 = scmp.eq.s32.totalorder %s27, 0
      %p159 = por %p157, %p158
      %s161 = sadd.s32 %s160, 1
      %p164 = scmp.eq.s32.totalorder %s21, 1
      %p165 = scmp.ne.s32.totalorder %s160, %s162
      %p166 = scmp.eq.s32.totalorder %s21, 0
      %p167 = por %p165, %p166
      %p168 = scmp.ne.s32.totalorder %s160, %s162
      %p169 = scmp.eq.s32.totalorder %s26, 1
      %p170 = por %p168, %p169
      %p171 = scmp.ne.s32.totalorder %s162, %s163
      %p172 = scmp.eq.s32.totalorder %s26, 0
      %p173 = por %p171, %p172
      %p174 = scmp.ne.s32.totalorder %s162, %s163
      %p175 = scmp.eq.s32.totalorder %s27, 1
      %p176 = por %p174, %p175
      %p178 = scmp.ne.s32.totalorder %s163, %s177
      %p179 = scmp.eq.s32.totalorder %s27, 0
      %p180 = por %p178, %p179
      %s181 = ssub.s32 %s21, %s28
      %p182 = scmp.eq.s32.totalorder %s181, 0
      %s184 = sadd.s32 %s183, 1
      %s185 = scalar_select %p182, %s183, %s184
      %p188 = pneg %p182
      %p189 = scmp.eq.s32.totalorder %s21, 1
      %p190 = por %p188, %p189
      %p191 = scmp.ne.s32.totalorder %s183, %s186
      %p192 = scmp.eq.s32.totalorder %s21, 0
      %p193 = por %p191, %p192
      %p194 = scmp.ne.s32.totalorder %s183, %s186
      %p195 = scmp.eq.s32.totalorder %s26, 1
      %p196 = por %p194, %p195
      %p197 = scmp.ne.s32.totalorder %s186, %s187
      %p198 = scmp.eq.s32.totalorder %s26, 0
      %p199 = por %p197, %p198
      %p200 = scmp.ne.s32.totalorder %s186, %s187
      %p201 = scmp.eq.s32.totalorder %s27, 1
      %p202 = por %p200, %p201
      %p204 = scmp.ne.s32.totalorder %s187, %s203
      %p205 = scmp.eq.s32.totalorder %s27, 0
      %p206 = por %p204, %p205
      %p207 = scmp.le.s32.totalorder 1, %s21
      %p208 = scmp.lt.s32.totalorder %s21, 3
      %p209 = pnand %p207, %p208
      %p210 = pneg %p209
      // Predicated region
      $region9: #{tpu_custom_call.1} parent=5 // pred_check
        _
      $region10: #{tpu_custom_call.1} parent=5 // pred_check_branch
        %212 = sbr.rel (%p209) target = $region12
      $region11: #{tpu_custom_call.1} parent=5 // pred_region
        %s213 = ssub.s32 %s21, 1
        // Predicated region
        $region13: #{tpu_custom_call.1} parent=11 // pred_check
          %p214 = pneg %p68
        $region14: #{tpu_custom_call.1} parent=11 // pred_check_branch
          %216 = sbr.rel (%p214) target = $region16
        $region15: #{tpu_custom_call.1} parent=11 // pred_region
          %218 = vsyncadd [#allocation7], 0
          %s220 = sshll.u32 %s1, 4
          %s221 = int_to_ptr.hbm [resolvable:$true] %s220
          %s222 = sshll.u32 [#allocation6], 4
          %s223 = int_to_ptr.vmem [resolvable:$true] %s222
          %225 = dma.hbm_to_vmem [thread:$0]  %s221, 16, %s223, [#allocation7]
        $region16: #{tpu_custom_call.1} parent=11 // pred_fallthru
          _
        // Predicated region
        $region17: #{tpu_custom_call.1} parent=11 // pred_check
          %p226 = pneg %p89
        $region18: #{tpu_custom_call.1} parent=11 // pred_check_branch
          %228 = sbr.rel (%p226) target = $region20
        $region19: #{tpu_custom_call.1} parent=11 // pred_region
          _
        $region20: #{tpu_custom_call.1} parent=11 // pred_fallthru
          _
        // Predicated region
        $region21: #{tpu_custom_call.1} parent=11 // pred_check
          %p229 = pneg %p110
        $region22: #{tpu_custom_call.1} parent=11 // pred_check_branch
          %231 = sbr.rel (%p229) target = $region24
        $region23: #{tpu_custom_call.1} parent=11 // pred_region
          %233 = vsyncadd [#allocation7], 0
          %s234 = sshll.u32 %s3, 4
          %s235 = int_to_ptr.hbm [resolvable:$true] %s234
          %s236 = sshll.u32 [#allocation8], 4
          %s237 = int_to_ptr.vmem [resolvable:$true] %s236
          %242 = dma.hbm_to_vmem [thread:$0]  %s235, 256, %s237, [#allocation7], 64, 64, 4
        $region24: #{tpu_custom_call.1} parent=11 // pred_fallthru
          _
        // Predicated region
        $region25: #{tpu_custom_call.1} parent=11 // pred_check
          %p243 = pneg %p131
        $region26: #{tpu_custom_call.1} parent=11 // pred_check_branch
          %245 = sbr.rel (%p243) target = $region28
        $region27: #{tpu_custom_call.1} parent=11 // pred_region
          _
        $region28: #{tpu_custom_call.1} parent=11 // pred_fallthru
          _
        // Predicated region
        $region29: #{tpu_custom_call.1} parent=11 // pred_check
          %p246 = pneg %p152
        $region30: #{tpu_custom_call.1} parent=11 // pred_check_branch
          %248 = sbr.rel (%p246) target = $region32
        $region31: #{tpu_custom_call.1} parent=11 // pred_region
          %250 = vsyncadd [#allocation10], 0
          %s251 = sshll.u32 %s5, 4
          %s252 = int_to_ptr.hbm [resolvable:$true] %s251
          %s253 = sshll.u32 [#allocation9], 4
          %s254 = int_to_ptr.vmem [resolvable:$true] %s253
          %259 = dma.hbm_to_vmem [thread:$0]  %s252, 256, %s254, [#allocation10], 64, 64, 4
        $region32: #{tpu_custom_call.1} parent=11 // pred_fallthru
          _
        // Predicated region
        $region33: #{tpu_custom_call.1} parent=11 // pred_check
          %p260 = pneg %p173
        $region34: #{tpu_custom_call.1} parent=11 // pred_check_branch
          %262 = sbr.rel (%p260) target = $region36
        $region35: #{tpu_custom_call.1} parent=11 // pred_region
          _
        $region36: #{tpu_custom_call.1} parent=11 // pred_fallthru
          _
      $region12: #{tpu_custom_call.1} parent=5 // pred_fallthru
        _
      %p263 = scmp.lt.s32.totalorder %s21, 2
      // Predicated region
      $region37: #{tpu_custom_call.1} parent=5 // pred_check
        %p264 = pneg %p263
      $region38: #{tpu_custom_call.1} parent=5 // pred_check_branch
        %266 = sbr.rel (%p264) target = $region40
      $region39: #{tpu_custom_call.1} parent=5 // pred_region
        // Predicated region
        $region41: #{tpu_custom_call.1} parent=39 // pred_check
          %p267 = pneg %p41
        $region42: #{tpu_custom_call.1} parent=39 // pred_check_branch
          %269 = sbr.rel (%p267) target = $region44
        $region43: #{tpu_custom_call.1} parent=39 // pred_region
          %s270 = sand.u32 %s31, 1
          %s271 = scalar_lea.sflag [#allocation4], %s270
          %s272 = sand.u32 %s31, 1
          %s273 = smul.addr %s272, 8
          %s274 = scalar_lea.vmem [#allocation3], %s273
          %276 = vsyncadd %s271, 0
          %s277 = smul.addr %s21, 8
          %s278 = scalar_lea.hbm %s0, %s277
          %s280 = sshll.u32 %s278, 4
          %s281 = int_to_ptr.hbm [resolvable:$true] %s280
          %s282 = sshll.u32 %s274, 4
          %s283 = int_to_ptr.vmem [resolvable:$true] %s282
          %285 = dma.hbm_to_vmem [thread:$0]  %s281, 128, %s283, %s271
        $region44: #{tpu_custom_call.1} parent=39 // pred_fallthru
          _
      $region40: #{tpu_custom_call.1} parent=5 // pred_fallthru
        _
      %p286 = scmp.le.s32.totalorder 1, %s21
      %p287 = scmp.lt.s32.totalorder %s21, 3
      %p288 = pnand %p286, %p287
      %p289 = pneg %p288
      // Predicated region
      $region45: #{tpu_custom_call.1} parent=5 // pred_check
        _
      $region46: #{tpu_custom_call.1} parent=5 // pred_check_branch
        %291 = sbr.rel (%p288) target = $region48
      $region47: #{tpu_custom_call.1} parent=5 // pred_region
        %s292 = ssub.s32 %s21, 1
        %s293 = sand.u32 %s34, 1
        %s294 = scalar_lea.sflag [#allocation4], %s293
        %s295 = sand.u32 %s34, 1
        %s296 = smul.addr %s295, 8
        %s297 = scalar_lea.vmem [#allocation3], %s296
        // Predicated region
        $region49: #{tpu_custom_call.1} parent=47 // pred_check
          %p298 = pneg %p47
        $region50: #{tpu_custom_call.1} parent=47 // pred_check_branch
          %300 = sbr.rel (%p298) target = $region52
        $region51: #{tpu_custom_call.1} parent=47 // pred_region
          %302 = dma.done %s294, 128
        $region52: #{tpu_custom_call.1} parent=47 // pred_fallthru
          _
        // Predicated region
        $region53: #{tpu_custom_call.1} parent=47 // pred_check
          %p303 = pneg %p68
        $region54: #{tpu_custom_call.1} parent=47 // pred_check_branch
          %305 = sbr.rel (%p303) target = $region56
        $region55: #{tpu_custom_call.1} parent=47 // pred_region
          %307 = dma.done [#allocation7], 16
        $region56: #{tpu_custom_call.1} parent=47 // pred_fallthru
          _
        // Predicated region
        $region57: #{tpu_custom_call.1} parent=47 // pred_check
          %p308 = pneg %p110
        $region58: #{tpu_custom_call.1} parent=47 // pred_check_branch
          %310 = sbr.rel (%p308) target = $region60
        $region59: #{tpu_custom_call.1} parent=47 // pred_region
          %312 = dma.done [#allocation7], 256
        $region60: #{tpu_custom_call.1} parent=47 // pred_fallthru
          _
        // Predicated region
        $region61: #{tpu_custom_call.1} parent=47 // pred_check
          %p313 = pneg %p152
        $region62: #{tpu_custom_call.1} parent=47 // pred_check_branch
          %315 = sbr.rel (%p313) target = $region64
        $region63: #{tpu_custom_call.1} parent=47 // pred_region
          %317 = dma.done [#allocation10], 256
        $region64: #{tpu_custom_call.1} parent=47 // pred_fallthru
          _
        %s318 = sand.u32 %s34, 1
        %s319 = scalar_lea.sflag [#allocation4], %s318
        %s320 = sand.u32 %s34, 1
        %s321 = smul.addr %s320, 8
        %s322 = scalar_lea.vmem [#allocation3], %s321
        %p323 = pneg %p47
        %p324 = pneg %p44
        %p325 = pneg %p68
        %p326 = pneg %p65
        %p327 = pneg %p89
        %p328 = pneg %p86
        %p329 = pneg %p110
        %p330 = pneg %p107
        %p331 = pneg %p131
        %p332 = pneg %p128
        %p333 = pneg %p152
        %p334 = pneg %p149
        %p335 = pneg %p173
        %p336 = pneg %p170
        %p337 = pneg %p199
        %p338 = pneg %p196
        %s339 = sand.u32 %s186, 1
        %s340 = scalar_lea.sflag [#allocation5], %s339
        %s341 = sand.u32 %s186, 1
        %s342 = smul.addr %s341, 8
        %s343 = scalar_lea.vmem [#allocation11], %s342
        %v345 = vld [vmem:[%s297] sm:$0xff]
        %v346 = vld [vmem:[#allocation6] sm:$0x1]
        %v347 = vld [vmem:[%s2] sm:$0x1]
        %vm348 = vcmask 261120
        %v349 = vsel %vm348, %v345, 0.0
        %350 = vadd.xlane.f32.xlu0 %v349
        %v351 = vpop.xlane.xlu0 %350
        %v352 = vrcp.pop 32.0
        %v353 = vmul.f32 32.0, %v352
        %v354 = vsub.f32 1.0, %v353
        %v355 = vmul.f32 %v352, %v354
        %v356 = vadd.f32 %v352, %v355
        %vm357 = vweird.f32 %v352
        %v358 = vsel %vm357, %v352, %v356
        %v359 = vmul.f32 %v351, %v358
        %v360 = vsub.f32 %v345, %v359
        %v361 = vmul.f32 %v360, %v360
        %v362 = vsel %vm348, %v361, 0.0
        %363 = vadd.xlane.f32.xlu0 %v362
        %v364 = vpop.xlane.xlu0 %363
        %v365 = vmul.f32 %v364, %v358
        %v366 = vadd.f32 %v365, 1e-05
        %v367 = vrsqrt.pop %v366
        %v368 = vmul.f32 %v367, %v366
        %v369 = vmul.f32 %v368, %v367
        %v370 = vmul.f32 0.5, %v369
        %v371 = vsub.f32 1.5, %v370
        %v372 = vmul.f32 %v367, %v371
        %vm373 = vweird.f32 %v366
        %vm374 = vweird.f32 %v367
        %vm375 = vmor %vm373, %vm374
        %v376 = vsel %vm375, %v367, %v372
        %v377 = vmul.f32 %v360, %v376
        %v379 = vperm.slane %v346, 0
        %v381 = vmul.f32 %v377, %v379
        %v383 = vperm.slane %v347, 0
        %v385 = vadd.f32 %v381, %v383
        %v386 = vpack.c.bf16 %v385, %v385
        %v387 = vld [vmem:[#allocation8] sm:$0xf]
        %v388 = vld [vmem:[#allocation8 + $0x4] sm:$0xf]
        %v389 = vld [vmem:[#allocation8 + $0x8] sm:$0xf]
        %v390 = vld [vmem:[#allocation8 + $0xc] sm:$0xf]
        %v391 = vld [vmem:[%s4] sm:$0x1]
        %v393 = vperm.slane %v391, 0
        %v399 = vunpack.c.l.b16 %v387
        %v400 = vunpack.c.l.b16 %v388
        %v401 = vunpack.c.l.b16 %v389
        %v402 = vunpack.c.l.b16 %v390
        %v403 = vpack.c.b16 %v400, %v399
        %v404 = vpack.c.b16 %v402, %v401
        %v408 = vsel %vm348, %v386, 0
        %410 = vmatpush.bf16.msra.mxu0 0
        %411 = vmatpush.bf16.msra.mxu0 0
        %412 = vmatpush.bf16.msra.mxu0 0
        %413 = vmatpush.bf16.msra.mxu0 0
        %414 = vmatpush.bf16.msra.mxu0 0
        %415 = vmatpush.bf16.msra.mxu0 0
        %416 = vmatpush.bf16.msra.mxu0 %v404
        %417 = vmatpush.bf16.msra.mxu0 %v403
        %418 = vmatmul.bf16.gmra.mxu0 %v408
        %v419 = vpop.f32.mrf.mxu0
        %v420 = vadd.f32 %v393, %v419
        %v421 = vpop.f32.mrf.mxu0
        %422 = vdwg.mxu0
        %v423 = vpack.c.bf16 %v420, %v420
        %v424 = vlaneseq
        %v425 = vshrl.u32 %v424, 7
        %v426 = vlaneseq
        %v427 = vand.u32 %v426, 127
        %vm428 = vcmp.gt.s32.totalorder %v427, %v425
        %v429 = vsel %vm428, -1e+30, 0.0
        %v430 = vmul.f32 %v420, 0.35355338
        %v431 = vpack.c.bf16 %v430, %v430
        %v433 = vunpack.c.l.b16 %v423
        %v434 = vpack.c.b16 %v433, %v433
        %435 = vrot.lane.b32.xlu0 %v434, 96
        %v436 = vpop.permute.xlu0 %435
        %vm437 = vcmask 64512
        %v439 = vsel %vm437, %v431, 0
        %v442 = vsel %vm437, %v436, 0
        %444 = vmatpush.bf16.xpose.msra.mxu0 0
        %445 = vmatpush.bf16.xpose.msra.mxu0 0
        %446 = vmatpush.bf16.xpose.msra.mxu0 0
        %447 = vmatpush.bf16.xpose.msra.mxu0 0
        %448 = vmatpush.bf16.xpose.msra.mxu0 0
        %449 = vmatpush.bf16.xpose.msra.mxu0 0
        %450 = vmatpush.bf16.xpose.msra.mxu0 0
        %451 = vmatpush.bf16.xpose.msra.mxu0 %v442
        %452 = vmatmul.bf16.gmra.mxu0 %v439
        %v453 = vpop.f32.mrf.mxu0
        %v454 = vadd.f32 %v429, %v453
        %v455 = vpop.f32.mrf.mxu0
        %456 = vdwg.mxu0
        %v457 = vsel %vm437, %v454, -inf
        %458 = vmax.xlane.f32.xlu0 %v457
        %v459 = vpop.xlane.xlu0 %458
        %v460 = vsub.f32 %v454, %v459
        %v461 = vmul.f32 %v460, 1.442695
        %v462 = vpow.pop %v461
        %v463 = vsel %vm437, %v462, 0.0
        %464 = vadd.xlane.f32.xlu0 %v463
        %v465 = vpop.xlane.xlu0 %464
        %v466 = vrcp.pop %v465
        %v467 = vmul.f32 %v462, %v466
        %v468 = vpack.c.bf16 %v467, %v467
        %469 = vrot.lane.b32.xlu0 %v434, 64
        %v470 = vpop.permute.xlu0 %469
        %v472 = vsel %vm437, %v468, 0
        %vm474 = vcmask 1043456
        %v476 = vsel %vm474, %v470, 0
        %478 = vmatpush.bf16.msra.mxu0 0
        %479 = vmatpush.bf16.msra.mxu0 0
        %480 = vmatpush.bf16.msra.mxu0 0
        %481 = vmatpush.bf16.msra.mxu0 0
        %482 = vmatpush.bf16.msra.mxu0 0
        %483 = vmatpush.bf16.msra.mxu0 0
        %484 = vmatpush.bf16.msra.mxu0 0
        %485 = vmatpush.bf16.msra.mxu0 %v476
        %486 = vmatmul.bf16.gmra.mxu0 %v472
        %v487 = vpop.f32.mrf.mxu0
        %v488 = vadd.f32 0.0, %v487
        %v489 = vpop.f32.mrf.mxu0
        %490 = vdwg.mxu0
        %v491 = vpack.c.bf16 %v488, %v488
        %vm492 = vcmask 60416
        %493 = vst.msk [vmem:[#allocation2] sm:$0xf] %vm492, %v491
        %495 = vrot.lane.b32.xlu0 %v431, 120
        %v496 = vpop.permute.xlu0 %495
        %497 = vrot.lane.b32.xlu0 %v434, 88
        %v498 = vpop.permute.xlu0 %497
        %v500 = vsel %vm437, %v496, 0
        %v503 = vsel %vm437, %v498, 0
        %505 = vmatpush.bf16.xpose.msra.mxu0 0
        %506 = vmatpush.bf16.xpose.msra.mxu0 0
        %507 = vmatpush.bf16.xpose.msra.mxu0 0
        %508 = vmatpush.bf16.xpose.msra.mxu0 0
        %509 = vmatpush.bf16.xpose.msra.mxu0 0
        %510 = vmatpush.bf16.xpose.msra.mxu0 0
        %511 = vmatpush.bf16.xpose.msra.mxu0 0
        %512 = vmatpush.bf16.xpose.msra.mxu0 %v503
        %513 = vmatmul.bf16.gmra.mxu0 %v500
        %v514 = vpop.f32.mrf.mxu0
        %v515 = vadd.f32 %v429, %v514
        %v516 = vpop.f32.mrf.mxu0
        %517 = vdwg.mxu0
        %v518 = vsel %vm437, %v515, -inf
        %519 = vmax.xlane.f32.xlu0 %v518
        %v520 = vpop.xlane.xlu0 %519
        %v521 = vsub.f32 %v515, %v520
        %v522 = vmul.f32 %v521, 1.442695
        %v523 = vpow.pop %v522
        %v524 = vsel %vm437, %v523, 0.0
        %525 = vadd.xlane.f32.xlu0 %v524
        %v526 = vpop.xlane.xlu0 %525
        %v527 = vrcp.pop %v526
        %v528 = vmul.f32 %v523, %v527
        %v529 = vpack.c.bf16 %v528, %v528
        %530 = vrot.lane.b32.xlu0 %v434, 56
        %v531 = vpop.permute.xlu0 %530
        %v533 = vsel %vm437, %v529, 0
        %v536 = vsel %vm474, %v531, 0
        %538 = vmatpush.bf16.msra.mxu0 0
        %539 = vmatpush.bf16.msra.mxu0 0
        %540 = vmatpush.bf16.msra.mxu0 0
        %541 = vmatpush.bf16.msra.mxu0 0
        %542 = vmatpush.bf16.msra.mxu0 0
        %543 = vmatpush.bf16.msra.mxu0 0
        %544 = vmatpush.bf16.msra.mxu0 0
        %545 = vmatpush.bf16.msra.mxu0 %v536
        %546 = vmatmul.bf16.gmra.mxu0 %v533
        %v547 = vpop.f32.mrf.mxu0
        %v548 = vadd.f32 0.0, %v547
        %v549 = vpop.f32.mrf.mxu0
        %550 = vdwg.mxu0
        %v551 = vpack.c.bf16 %v548, %v548
        %553 = vrot.lane.b32.xlu0 %v551, 8
        %v554 = vpop.permute.xlu0 %553
        %vm556 = vcmask 126016
        %557 = vst.msk [vmem:[#allocation2] sm:$0xf] %vm556, %v554
        %558 = vrot.lane.b32.xlu0 %v431, 112
        %v559 = vpop.permute.xlu0 %558
        %560 = vrot.lane.b32.xlu0 %v434, 80
        %v561 = vpop.permute.xlu0 %560
        %v563 = vsel %vm437, %v559, 0
        %v566 = vsel %vm437, %v561, 0
        %568 = vmatpush.bf16.xpose.msra.mxu0 0
        %569 = vmatpush.bf16.xpose.msra.mxu0 0
        %570 = vmatpush.bf16.xpose.msra.mxu0 0
        %571 = vmatpush.bf16.xpose.msra.mxu0 0
        %572 = vmatpush.bf16.xpose.msra.mxu0 0
        %573 = vmatpush.bf16.xpose.msra.mxu0 0
        %574 = vmatpush.bf16.xpose.msra.mxu0 0
        %575 = vmatpush.bf16.xpose.msra.mxu0 %v566
        %576 = vmatmul.bf16.gmra.mxu0 %v563
        %v577 = vpop.f32.mrf.mxu0
        %v578 = vadd.f32 %v429, %v577
        %v579 = vpop.f32.mrf.mxu0
        %580 = vdwg.mxu0
        %v581 = vsel %vm437, %v578, -inf
        %582 = vmax.xlane.f32.xlu0 %v581
        %v583 = vpop.xlane.xlu0 %582
        %v584 = vsub.f32 %v578, %v583
        %v585 = vmul.f32 %v584, 1.442695
        %v586 = vpow.pop %v585
        %v587 = vsel %vm437, %v586, 0.0
        %588 = vadd.xlane.f32.xlu0 %v587
        %v589 = vpop.xlane.xlu0 %588
        %v590 = vrcp.pop %v589
        %v591 = vmul.f32 %v586, %v590
        %v592 = vpack.c.bf16 %v591, %v591
        %593 = vrot.lane.b32.xlu0 %v434, 48
        %v594 = vpop.permute.xlu0 %593
        %v596 = vsel %vm437, %v592, 0
        %v599 = vsel %vm474, %v594, 0
        %601 = vmatpush.bf16.msra.mxu0 0
        %602 = vmatpush.bf16.msra.mxu0 0
        %603 = vmatpush.bf16.msra.mxu0 0
        %604 = vmatpush.bf16.msra.mxu0 0
        %605 = vmatpush.bf16.msra.mxu0 0
        %606 = vmatpush.bf16.msra.mxu0 0
        %607 = vmatpush.bf16.msra.mxu0 0
        %608 = vmatpush.bf16.msra.mxu0 %v599
        %609 = vmatmul.bf16.gmra.mxu0 %v596
        %v610 = vpop.f32.mrf.mxu0
        %v611 = vadd.f32 0.0, %v610
        %v612 = vpop.f32.mrf.mxu0
        %613 = vdwg.mxu0
        %v614 = vpack.c.bf16 %v611, %v611
        %616 = vrot.lane.b32.xlu0 %v614, 16
        %v617 = vpop.permute.xlu0 %616
        %vm619 = vcmask 191616
        %620 = vst.msk [vmem:[#allocation2] sm:$0xf] %vm619, %v617
        %621 = vrot.lane.b32.xlu0 %v431, 104
        %v622 = vpop.permute.xlu0 %621
        %623 = vrot.lane.b32.xlu0 %v434, 72
        %v624 = vpop.permute.xlu0 %623
        %v626 = vsel %vm437, %v622, 0
        %v629 = vsel %vm437, %v624, 0
        %631 = vmatpush.bf16.xpose.msra.mxu0 0
        %632 = vmatpush.bf16.xpose.msra.mxu0 0
        %633 = vmatpush.bf16.xpose.msra.mxu0 0
        %634 = vmatpush.bf16.xpose.msra.mxu0 0
        %635 = vmatpush.bf16.xpose.msra.mxu0 0
        %636 = vmatpush.bf16.xpose.msra.mxu0 0
        %637 = vmatpush.bf16.xpose.msra.mxu0 0
        %638 = vmatpush.bf16.xpose.msra.mxu0 %v629
        %639 = vmatmul.bf16.gmra.mxu0 %v626
        %v640 = vpop.f32.mrf.mxu0
        %v641 = vadd.f32 %v429, %v640
        %v642 = vpop.f32.mrf.mxu0
        %643 = vdwg.mxu0
        %v644 = vsel %vm437, %v641, -inf
        %645 = vmax.xlane.f32.xlu0 %v644
        %v646 = vpop.xlane.xlu0 %645
        %v647 = vsub.f32 %v641, %v646
        %v648 = vmul.f32 %v647, 1.442695
        %v649 = vpow.pop %v648
        %v650 = vsel %vm437, %v649, 0.0
        %651 = vadd.xlane.f32.xlu0 %v650
        %v652 = vpop.xlane.xlu0 %651
        %v653 = vrcp.pop %v652
        %v654 = vmul.f32 %v649, %v653
        %v655 = vpack.c.bf16 %v654, %v654
        %656 = vrot.lane.b32.xlu0 %v434, 40
        %v657 = vpop.permute.xlu0 %656
        %v659 = vsel %vm437, %v655, 0
        %v662 = vsel %vm474, %v657, 0
        %664 = vmatpush.bf16.msra.mxu0 0
        %665 = vmatpush.bf16.msra.mxu0 0
        %666 = vmatpush.bf16.msra.mxu0 0
        %667 = vmatpush.bf16.msra.mxu0 0
        %668 = vmatpush.bf16.msra.mxu0 0
        %669 = vmatpush.bf16.msra.mxu0 0
        %670 = vmatpush.bf16.msra.mxu0 0
        %671 = vmatpush.bf16.msra.mxu0 %v662
        %672 = vmatmul.bf16.gmra.mxu0 %v659
        %v673 = vpop.f32.mrf.mxu0
        %v674 = vadd.f32 0.0, %v673
        %v675 = vpop.f32.mrf.mxu0
        %676 = vdwg.mxu0
        %v677 = vpack.c.bf16 %v674, %v674
        %679 = vrot.lane.b32.xlu0 %v677, 24
        %v680 = vpop.permute.xlu0 %679
        %vm682 = vcmask 257216
        %683 = vst.msk [vmem:[#allocation2] sm:$0xf] %vm682, %v680
        %v684 = vld [vmem:[#allocation2] sm:$0xf]
        %v685 = vld [vmem:[#allocation9] sm:$0xf]
        %v686 = vld [vmem:[#allocation9 + $0x4] sm:$0xf]
        %v687 = vld [vmem:[#allocation9 + $0x8] sm:$0xf]
        %v688 = vld [vmem:[#allocation9 + $0xc] sm:$0xf]
        %v689 = vld [vmem:[%s6] sm:$0x1]
        %v691 = vperm.slane %v689, 0
        %v697 = vunpack.c.l.b16 %v685
        %v698 = vunpack.c.l.b16 %v686
        %v699 = vunpack.c.l.b16 %v687
        %v700 = vunpack.c.l.b16 %v688
        %v701 = vpack.c.b16 %v698, %v697
        %v702 = vpack.c.b16 %v700, %v699
        %v706 = vsel %vm348, %v684, 0
        %708 = vmatpush.bf16.msra.mxu0 0
        %709 = vmatpush.bf16.msra.mxu0 0
        %710 = vmatpush.bf16.msra.mxu0 0
        %711 = vmatpush.bf16.msra.mxu0 0
        %712 = vmatpush.bf16.msra.mxu0 0
        %713 = vmatpush.bf16.msra.mxu0 0
        %714 = vmatpush.bf16.msra.mxu0 %v702
        %715 = vmatpush.bf16.msra.mxu0 %v701
        %716 = vmatmul.bf16.gmra.mxu0 %v706
        %v717 = vpop.f32.mrf.mxu0
        %v718 = vadd.f32 %v691, %v717
        %v719 = vpop.f32.mrf.mxu0
        %720 = vdwg.mxu0
        %v721 = vadd.f32 %v345, %v718
        %722 = vst.msk [vmem:[%s343] sm:$0xff] %vm348, %v721
        %s723 = sand.u32 %s186, 1
        %s724 = scalar_lea.sflag [#allocation5], %s723
        %s725 = sand.u32 %s186, 1
        %s726 = smul.addr %s725, 8
        %s727 = scalar_lea.vmem [#allocation11], %s726
        // Predicated region
        $region65: #{tpu_custom_call.1} parent=47 // pred_check
          %p728 = pneg %p196
        $region66: #{tpu_custom_call.1} parent=47 // pred_check_branch
          %730 = sbr.rel (%p728) target = $region68
        $region67: #{tpu_custom_call.1} parent=47 // pred_region
          %732 = vsyncadd %s724, 0
          %s733 = smul.addr %s26, 8
          %s734 = scalar_lea.hbm %s7, %s733
          %s736 = sshll.u32 %s727, 4
          %s737 = int_to_ptr.vmem [resolvable:$true] %s736
          %s738 = sshll.u32 %s734, 4
          %s739 = int_to_ptr.hbm [resolvable:$true] %s738
          %741 = dma.vmem_to_hbm [thread:$0]  %s737, 128, %s739, %s724
        $region68: #{tpu_custom_call.1} parent=47 // pred_fallthru
          _
      $region48: #{tpu_custom_call.1} parent=5 // pred_fallthru
        _
      %p742 = scmp.le.s32.totalorder 2, %s21
      // Predicated region
      $region69: #{tpu_custom_call.1} parent=5 // pred_check
        %p743 = pneg %p742
      $region70: #{tpu_custom_call.1} parent=5 // pred_check_branch
        %745 = sbr.rel (%p743) target = $region72
      $region71: #{tpu_custom_call.1} parent=5 // pred_region
        %s746 = ssub.s32 %s21, 2
        // Predicated region
        $region73: #{tpu_custom_call.1} parent=71 // pred_check
          %p747 = pneg %p202
        $region74: #{tpu_custom_call.1} parent=71 // pred_check_branch
          %749 = sbr.rel (%p747) target = $region76
        $region75: #{tpu_custom_call.1} parent=71 // pred_region
          %s750 = sand.u32 %s187, 1
          %s751 = scalar_lea.sflag [#allocation5], %s750
          %s752 = sand.u32 %s187, 1
          %s753 = smul.addr %s752, 8
          %s754 = scalar_lea.vmem [#allocation11], %s753
          %756 = dma.done %s751, 128
        $region76: #{tpu_custom_call.1} parent=71 // pred_fallthru
          _
      $region72: #{tpu_custom_call.1} parent=5 // pred_fallthru
        _
    $region6: #{tpu_custom_call.1} parent=1 // loop_footer
      %s25 = sadd.s32 1, %s21
    $region7: #{tpu_custom_call.1} parent=1 // loop_footer_branch
      %20 = sbr.rel target = $region3
    $region8: #{tpu_custom_call.1} parent=1 // loop_exit
      _
    %757 = vsyncpa [#allocation4], 1
    %s758 = scalar_lea.sflag [#allocation4], 1
    %759 = vsyncpa %s758, 1
    %760 = vsyncpa [#allocation7], 1
    %761 = vsyncpa [#allocation10], 1
    %762 = vsyncpa [#allocation5], 1
    %s763 = scalar_lea.sflag [#allocation5], 1
    %764 = vsyncpa %s763, 1

</llo_original>
